<compile_context>
chip_gen: v7x
topology: tpu7x:2x2x1
jax: 0.10.0
libtpu: 0.0.40
codegen_flags: <defaults>
</compile_context>

<pallas_src>
import math

import jax
import jax.numpy as jnp
from jax.experimental import pallas as pl
from jax.experimental.pallas import tpu as pltpu


def _linear_vpu_kernel(x_ref, w_ref, o_ref):
    """VPU multiply-accumulate linear for tiny (B, N).

    x_ref: (B, tkr, 128)   activation rows of this K tile (native dtype)
    w_ref: (N, tkr, 128)   weight rows of this K tile (bf16 or f32)
    o_ref: (1, B*N, 128)   resident f32 lane-wise partial sums (accumulator)
    """
    @pl.when(pl.program_id(1) == 0)
    def _():
        o_ref[...] = jnp.zeros_like(o_ref)

    B = x_ref.shape[0]
    N = w_ref.shape[0]
    for b in range(B):
        xb = x_ref[b].astype(jnp.float32)            # (tkr, 128)
        for n in range(N):
            wn = w_ref[n].astype(jnp.float32)        # (tkr, 128)
            # Pure-VPU MAC; reduce only along the sublane (second-minor)
            # direction so the lane dim stays dense (final cross-lane reduce
            # is done once, in the wrapper, on a few KB).
            part = jnp.sum(xb * wn, axis=0, keepdims=True)   # (1, 128)
            row = b * N + n
            o_ref[0, pl.ds(row, 1), :] += part


def _choose_row_tiling(K, tkr_target, num_splits, *, lane=128, sublane=8):
    """Pick (tkr, n_k, K_pad): rows per block, K-steps per split, padded K.

    "Rows" are 128-lane groups of K.  Prefer a tiling where tkr is a multiple
    of 8 (full (8,128) tiles) and num_splits * n_k * tkr covers K exactly, so
    no padding/copy of x or the weight is ever materialized.  Otherwise pad the
    K tail with zeros (zeros contribute nothing to the dot).
    """
    rows = -(-K // lane)
    tkr_target = max(sublane, (int(tkr_target) // sublane) * sublane)
    if K % lane == 0 and rows % sublane == 0:
        nb = max(num_splits, -(-rows // tkr_target))
        nb = -(-nb // num_splits) * num_splits           # multiple of num_splits
        while nb <= rows // sublane:
            if rows % nb == 0 and (rows // nb) % sublane == 0:
                return rows // nb, nb // num_splits, rows * lane   # exact fit
            nb += num_splits
    # Fallback (cold path): sublane-aligned tkr, pad the K tail.
    tkr = min(tkr_target, -(-rows // sublane) * sublane)
    nb = -(-(-(-rows // tkr)) // num_splits) * num_splits
    return tkr, nb // num_splits, nb * tkr * lane


def prepare_linear_params(weight, bias, *, weight_dtype=jnp.bfloat16,
                          tk_target=262144, num_k_splits=1):
    """ONE-TIME parameter preparation (do NOT call per forward).

    Persistently casts the weight to `weight_dtype` (bf16 halves the dominant
    HBM stream), reshapes it to the lane-dense (N, K/128, 128) layout, pads the
    K tail once if the chosen tiling requires it, and records the tiling.
    """
    N, K = weight.shape
    tkr, n_k, K_pad = _choose_row_tiling(K, tk_target // 128, num_k_splits)
    w = weight.astype(weight_dtype) if weight_dtype is not None else weight
    if K_pad != K:
        w = jnp.pad(w, ((0, 0), (0, K_pad - K)))
    w3 = w.reshape(N, K_pad // 128, 128)
    return {
        "w3": w3, "bias": bias, "K": K, "K_pad": K_pad,
        "tkr": tkr, "n_k": n_k, "num_k_splits": num_k_splits,
    }


def pallas_linear(x_flat, params, *, core_parallel_split=False):
    """y = x_flat @ W^T + b, with W/b pre-packed by prepare_linear_params.

    x_flat: (B, K) activations, streamed in their native dtype.
    The kernel is HBM-bandwidth bound; all streamed blocks are (8,128)-aligned
    and the contraction runs on the VPU (the MXU would be >95% idle for N=4
    and its K-streaming cadence would bound the step instead of the DMA).
    """
    B, K = x_flat.shape
    w3 = params["w3"]
    assert K == params["K"], "weight in_features must match flattened input"
    N = w3.shape[0]
    K_pad, tkr, n_k = params["K_pad"], params["tkr"], params["n_k"]
    ns = params["num_k_splits"]

    if K_pad != K:
        # TODO(synk): cold path -- mask the K tail in-kernel instead of copying x.
        x_flat = jnp.pad(x_flat, ((0, 0), (0, K_pad - K)))
    x3 = x_flat.reshape(B, K_pad // 128, 128)   # free view of a contiguous array

    # Mem-bound kernel: give XLA the true traffic so it schedules around it.
    cost = pl.CostEstimate(
        flops=2 * B * K_pad * N,
        transcendentals=0,
        bytes_accessed=int(x3.size * x3.dtype.itemsize
                           + w3.size * w3.dtype.itemsize
                           + ns * B * N * 128 * 4),
    )

    split_sem = "parallel"
    if core_parallel_split:
        # v7x (2 TensorCores/chip): actually shard the K split across cores.
        split_sem = pltpu.CORE_PARALLEL

    partials = pl.pallas_call(
        _linear_vpu_kernel,
        out_shape=jax.ShapeDtypeStruct((ns, B * N, 128), jnp.float32),
        grid_spec=pltpu.PrefetchScalarGridSpec(
            num_scalar_prefetch=0,
            grid=(ns, n_k),
            in_specs=[
                pl.BlockSpec((B, tkr, 128), lambda c, k: (0, c * n_k + k, 0)),
                pl.BlockSpec((N, tkr, 128), lambda c, k: (0, c * n_k + k, 0)),
            ],
            out_specs=pl.BlockSpec((1, B * N, 128), lambda c, k: (c, 0, 0)),
        ),
        compiler_params=pltpu.CompilerParams(
            dimension_semantics=(split_sem, "arbitrary"),
        ),
        cost_estimate=cost,
    )(x3, w3)

    # Tiny combine (few KB): fold the split and lane axes, add the bias.
    y = partials.sum(axis=(0, 2)).reshape(B, N)
    return y + params["bias"][None, :]


def segmentation_module_forward(x_nchw, linear_params):
    """Forward pass of SegmentationModule (body/head = identity).

    x_nchw: (B, C, H, W) float32 (NCHW, like PyTorch).
    Returns sem_logits: (B, 4) float32.
    """
    # TODO(synk): body/head are externally supplied in the original script;
    # modeled as identity maps here.
    B = x_nchw.shape[0]
    x_flat = x_nchw.reshape(B, -1)   # torch-style reshape(B, -1): (C, H, W) order
    return pallas_linear(x_flat, linear_params)


if __name__ == "__main__":
    # Small shapes consistent with the module's forward semantics.
    # Original uses Linear(1228800, 4); here K = C*H*W = 4*16*16 = 1024.
    B, C, H, W = 2, 4, 16, 16
    N_OUT = 4
    K = C * H * W

    key = jax.random.PRNGKey(0)
    kx, kw, kb = jax.random.split(key, 3)

    x = jax.random.normal(kx, (B, C, H, W), dtype=jnp.float32)

    # Deterministic nn.Linear-style init: U(-1/sqrt(K), 1/sqrt(K))
    bound = 1.0 / math.sqrt(K)
    weight = jax.random.uniform(kw, (N_OUT, K), jnp.float32, -bound, bound)
    bias = jax.random.uniform(kb, (N_OUT,), jnp.float32, -bound, bound)

    # One-time parameter prep (persistent bf16 weight, lane-dense layout).
    params = prepare_linear_params(weight, bias)

    sem_logits = segmentation_module_forward(x, params)
    jax.block_until_ready(sem_logits)

    # Cross-check against a plain-JAX reference of the same computation
    # (bf16-rounded weight, f32 accumulation).
    w_eff = params["w3"].reshape(N_OUT, -1)[:, :K].astype(jnp.float32)
    ref = x.reshape(B, -1) @ w_eff.T + bias
    assert sem_logits.shape == (B, N_OUT)
    assert jnp.allclose(sem_logits, ref, atol=1e-4, rtol=1e-4)

    print("KERNEL_OK")
</pallas_src>

<mosaic_0001>
module attributes {stable_mosaic.version = 11 : i64} {
  func.func @_linear_vpu_kernel(%arg0: i32, %arg1: i32, %arg2: memref<2x8x128xf32, #tpu.memory_space<vmem>>, %arg3: memref<4x8x128xbf16, #tpu.memory_space<vmem>>, %arg4: memref<1x8x128xf32, #tpu.memory_space<vmem>>) attributes {dimension_semantics = [#tpu.dimension_semantics<parallel>, #tpu.dimension_semantics<arbitrary>], iteration_bounds = array<i64: 1, 1>, scalar_prefetch = 0 : i64, scratch_operands = 0 : i64, tpu.core_type = #tpu.core_type<tc>, window_params = [{transform_indices = @transform_0, window_bounds = array<i64: 2, 8, 128>}, {transform_indices = @transform_1, window_bounds = array<i64: 4, 8, 128>}, {transform_indices = @transform_2, window_bounds = array<i64: 1, 8, 128>}]} {
    %c0_i32 = arith.constant 0 : i32
    %0 = arith.cmpi eq, %arg1, %c0_i32 : i32
    %1 = arith.extui %0 : i1 to i32
    %c0_i32_0 = arith.constant 0 : i32
    %2 = arith.cmpi ne, %1, %c0_i32_0 : i32
    scf.if %2 {
      %cst_78 = arith.constant 0.000000e+00 : f32
      %103 = vector.broadcast %cst_78 : f32 to vector<1x8x128xf32>
      %c0_79 = arith.constant 0 : index
      %c0_80 = arith.constant 0 : index
      %c0_81 = arith.constant 0 : index
      %104 = vector.load %arg4[%c0_79, %c0_80, %c0_81] : memref<1x8x128xf32, #tpu.memory_space<vmem>>, vector<1x8x128xf32>
      tpu.vector_store %arg4[%c0_79, %c0_80, %c0_81], %103 {strides = array<i32>} : memref<1x8x128xf32, #tpu.memory_space<vmem>>, vector<1x8x128xf32>,
    } else {
    }
    %c0 = arith.constant 0 : index
    %c0_1 = arith.constant 0 : index
    %c0_2 = arith.constant 0 : index
    %3 = vector.load %arg2[%c0, %c0_1, %c0_2] : memref<2x8x128xf32, #tpu.memory_space<vmem>>, vector<1x8x128xf32>
    %4 = vector.shape_cast %3 : vector<1x8x128xf32> to vector<8x128xf32>
    %c0_3 = arith.constant 0 : index
    %c0_4 = arith.constant 0 : index
    %c0_5 = arith.constant 0 : index
    %5 = vector.load %arg3[%c0_3, %c0_4, %c0_5] : memref<4x8x128xbf16, #tpu.memory_space<vmem>>, vector<1x8x128xbf16>
    %6 = vector.shape_cast %5 : vector<1x8x128xbf16> to vector<8x128xbf16>
    %7 = arith.extf %6 : vector<8x128xbf16> to vector<8x128xf32>
    %8 = arith.mulf %4, %7 : vector<8x128xf32>
    %cst = arith.constant dense<0.000000e+00> : vector<128xf32>
    %9 = vector.multi_reduction <add>, %8, %cst [0] : vector<8x128xf32> to vector<128xf32>
    %10 = vector.shape_cast %9 : vector<128xf32> to vector<1x128xf32>
    %c0_6 = arith.constant 0 : index
    %c0_7 = arith.constant 0 : index
    %c0_8 = arith.constant 0 : index
    %11 = vector.load %arg4[%c0_6, %c0_7, %c0_8] : memref<1x8x128xf32, #tpu.memory_space<vmem>>, vector<1x1x128xf32>
    %12 = vector.shape_cast %11 : vector<1x1x128xf32> to vector<1x128xf32>
    %13 = arith.addf %12, %10 : vector<1x128xf32>
    %c0_9 = arith.constant 0 : index
    %c0_10 = arith.constant 0 : index
    %c0_11 = arith.constant 0 : index
    %14 = vector.load %arg4[%c0_9, %c0_10, %c0_11] : memref<1x8x128xf32, #tpu.memory_space<vmem>>, vector<1x1x128xf32>
    %15 = vector.shape_cast %14 : vector<1x1x128xf32> to vector<1x128xf32>
    %16 = vector.shape_cast %13 : vector<1x128xf32> to vector<1x1x128xf32>
    tpu.vector_store %arg4[%c0_9, %c0_10, %c0_11], %16 {strides = array<i32>} : memref<1x8x128xf32, #tpu.memory_space<vmem>>, vector<1x1x128xf32>,
    %c1 = arith.constant 1 : index
    %c0_12 = arith.constant 0 : index
    %c0_13 = arith.constant 0 : index
    %17 = vector.load %arg3[%c1, %c0_12, %c0_13] : memref<4x8x128xbf16, #tpu.memory_space<vmem>>, vector<1x8x128xbf16>
    %18 = vector.shape_cast %17 : vector<1x8x128xbf16> to vector<8x128xbf16>
    %19 = arith.extf %18 : vector<8x128xbf16> to vector<8x128xf32>
    %20 = arith.mulf %4, %19 : vector<8x128xf32>
    %cst_14 = arith.constant dense<0.000000e+00> : vector<128xf32>
    %21 = vector.multi_reduction <add>, %20, %cst_14 [0] : vector<8x128xf32> to vector<128xf32>
    %22 = vector.shape_cast %21 : vector<128xf32> to vector<1x128xf32>
    %c0_15 = arith.constant 0 : index
    %c1_16 = arith.constant 1 : index
    %c0_17 = arith.constant 0 : index
    %23 = vector.load %arg4[%c0_15, %c1_16, %c0_17] : memref<1x8x128xf32, #tpu.memory_space<vmem>>, vector<1x1x128xf32>
    %24 = vector.shape_cast %23 : vector<1x1x128xf32> to vector<1x128xf32>
    %25 = arith.addf %24, %22 : vector<1x128xf32>
    %c0_18 = arith.constant 0 : index
    %c1_19 = arith.constant 1 : index
    %c0_20 = arith.constant 0 : index
    %26 = vector.load %arg4[%c0_18, %c1_19, %c0_20] : memref<1x8x128xf32, #tpu.memory_space<vmem>>, vector<1x1x128xf32>
    %27 = vector.shape_cast %26 : vector<1x1x128xf32> to vector<1x128xf32>
    %28 = vector.shape_cast %25 : vector<1x128xf32> to vector<1x1x128xf32>
    tpu.vector_store %arg4[%c0_18, %c1_19, %c0_20], %28 {strides = array<i32>} : memref<1x8x128xf32, #tpu.memory_space<vmem>>, vector<1x1x128xf32>,
    %c2 = arith.constant 2 : index
    %c0_21 = arith.constant 0 : index
    %c0_22 = arith.constant 0 : index
    %29 = vector.load %arg3[%c2, %c0_21, %c0_22] : memref<4x8x128xbf16, #tpu.memory_space<vmem>>, vector<1x8x128xbf16>
    %30 = vector.shape_cast %29 : vector<1x8x128xbf16> to vector<8x128xbf16>
    %31 = arith.extf %30 : vector<8x128xbf16> to vector<8x128xf32>
    %32 = arith.mulf %4, %31 : vector<8x128xf32>
    %cst_23 = arith.constant dense<0.000000e+00> : vector<128xf32>
    %33 = vector.multi_reduction <add>, %32, %cst_23 [0] : vector<8x128xf32> to vector<128xf32>
    %34 = vector.shape_cast %33 : vector<128xf32> to vector<1x128xf32>
    %c0_24 = arith.constant 0 : index
    %c2_25 = arith.constant 2 : index
    %c0_26 = arith.constant 0 : index
    %35 = vector.load %arg4[%c0_24, %c2_25, %c0_26] : memref<1x8x128xf32, #tpu.memory_space<vmem>>, vector<1x1x128xf32>
    %36 = vector.shape_cast %35 : vector<1x1x128xf32> to vector<1x128xf32>
    %37 = arith.addf %36, %34 : vector<1x128xf32>
    %c0_27 = arith.constant 0 : index
    %c2_28 = arith.constant 2 : index
    %c0_29 = arith.constant 0 : index
    %38 = vector.load %arg4[%c0_27, %c2_28, %c0_29] : memref<1x8x128xf32, #tpu.memory_space<vmem>>, vector<1x1x128xf32>
    %39 = vector.shape_cast %38 : vector<1x1x128xf32> to vector<1x128xf32>
    %40 = vector.shape_cast %37 : vector<1x128xf32> to vector<1x1x128xf32>
    tpu.vector_store %arg4[%c0_27, %c2_28, %c0_29], %40 {strides = array<i32>} : memref<1x8x128xf32, #tpu.memory_space<vmem>>, vector<1x1x128xf32>,
    %c3 = arith.constant 3 : index
    %c0_30 = arith.constant 0 : index
    %c0_31 = arith.constant 0 : index
    %41 = vector.load %arg3[%c3, %c0_30, %c0_31] : memref<4x8x128xbf16, #tpu.memory_space<vmem>>, vector<1x8x128xbf16>
    %42 = vector.shape_cast %41 : vector<1x8x128xbf16> to vector<8x128xbf16>
    %43 = arith.extf %42 : vector<8x128xbf16> to vector<8x128xf32>
    %44 = arith.mulf %4, %43 : vector<8x128xf32>
    %cst_32 = arith.constant dense<0.000000e+00> : vector<128xf32>
    %45 = vector.multi_reduction <add>, %44, %cst_32 [0] : vector<8x128xf32> to vector<128xf32>
    %46 = vector.shape_cast %45 : vector<128xf32> to vector<1x128xf32>
    %c0_33 = arith.constant 0 : index
    %c3_34 = arith.constant 3 : index
    %c0_35 = arith.constant 0 : index
    %47 = vector.load %arg4[%c0_33, %c3_34, %c0_35] : memref<1x8x128xf32, #tpu.memory_space<vmem>>, vector<1x1x128xf32>
    %48 = vector.shape_cast %47 : vector<1x1x128xf32> to vector<1x128xf32>
    %49 = arith.addf %48, %46 : vector<1x128xf32>
    %c0_36 = arith.constant 0 : index
    %c3_37 = arith.constant 3 : index
    %c0_38 = arith.constant 0 : index
    %50 = vector.load %arg4[%c0_36, %c3_37, %c0_38] : memref<1x8x128xf32, #tpu.memory_space<vmem>>, vector<1x1x128xf32>
    %51 = vector.shape_cast %50 : vector<1x1x128xf32> to vector<1x128xf32>
    %52 = vector.shape_cast %49 : vector<1x128xf32> to vector<1x1x128xf32>
    tpu.vector_store %arg4[%c0_36, %c3_37, %c0_38], %52 {strides = array<i32>} : memref<1x8x128xf32, #tpu.memory_space<vmem>>, vector<1x1x128xf32>,
    %c1_39 = arith.constant 1 : index
    %c0_40 = arith.constant 0 : index
    %c0_41 = arith.constant 0 : index
    %53 = vector.load %arg2[%c1_39, %c0_40, %c0_41] : memref<2x8x128xf32, #tpu.memory_space<vmem>>, vector<1x8x128xf32>
    %54 = vector.shape_cast %53 : vector<1x8x128xf32> to vector<8x128xf32>
    %c0_42 = arith.constant 0 : index
    %c0_43 = arith.constant 0 : index
    %c0_44 = arith.constant 0 : index
    %55 = vector.load %arg3[%c0_42, %c0_43, %c0_44] : memref<4x8x128xbf16, #tpu.memory_space<vmem>>, vector<1x8x128xbf16>
    %56 = vector.shape_cast %55 : vector<1x8x128xbf16> to vector<8x128xbf16>
    %57 = arith.extf %56 : vector<8x128xbf16> to vector<8x128xf32>
    %58 = arith.mulf %54, %57 : vector<8x128xf32>
    %cst_45 = arith.constant dense<0.000000e+00> : vector<128xf32>
    %59 = vector.multi_reduction <add>, %58, %cst_45 [0] : vector<8x128xf32> to vector<128xf32>
    %60 = vector.shape_cast %59 : vector<128xf32> to vector<1x128xf32>
    %c0_46 = arith.constant 0 : index
    %c4 = arith.constant 4 : index
    %c0_47 = arith.constant 0 : index
    %61 = vector.load %arg4[%c0_46, %c4, %c0_47] : memref<1x8x128xf32, #tpu.memory_space<vmem>>, vector<1x1x128xf32>
    %62 = vector.shape_cast %61 : vector<1x1x128xf32> to vector<1x128xf32>
    %63 = arith.addf %62, %60 : vector<1x128xf32>
    %c0_48 = arith.constant 0 : index
    %c4_49 = arith.constant 4 : index
    %c0_50 = arith.constant 0 : index
    %64 = vector.load %arg4[%c0_48, %c4_49, %c0_50] : memref<1x8x128xf32, #tpu.memory_space<vmem>>, vector<1x1x128xf32>
    %65 = vector.shape_cast %64 : vector<1x1x128xf32> to vector<1x128xf32>
    %66 = vector.shape_cast %63 : vector<1x128xf32> to vector<1x1x128xf32>
    tpu.vector_store %arg4[%c0_48, %c4_49, %c0_50], %66 {strides = array<i32>} : memref<1x8x128xf32, #tpu.memory_space<vmem>>, vector<1x1x128xf32>,
    %c1_51 = arith.constant 1 : index
    %c0_52 = arith.constant 0 : index
    %c0_53 = arith.constant 0 : index
    %67 = vector.load %arg3[%c1_51, %c0_52, %c0_53] : memref<4x8x128xbf16, #tpu.memory_space<vmem>>, vector<1x8x128xbf16>
    %68 = vector.shape_cast %67 : vector<1x8x128xbf16> to vector<8x128xbf16>
    %69 = arith.extf %68 : vector<8x128xbf16> to vector<8x128xf32>
    %70 = arith.mulf %54, %69 : vector<8x128xf32>
    %cst_54 = arith.constant dense<0.000000e+00> : vector<128xf32>
    %71 = vector.multi_reduction <add>, %70, %cst_54 [0] : vector<8x128xf32> to vector<128xf32>
    %72 = vector.shape_cast %71 : vector<128xf32> to vector<1x128xf32>
    %c0_55 = arith.constant 0 : index
    %c5 = arith.constant 5 : index
    %c0_56 = arith.constant 0 : index
    %73 = vector.load %arg4[%c0_55, %c5, %c0_56] : memref<1x8x128xf32, #tpu.memory_space<vmem>>, vector<1x1x128xf32>
    %74 = vector.shape_cast %73 : vector<1x1x128xf32> to vector<1x128xf32>
    %75 = arith.addf %74, %72 : vector<1x128xf32>
    %c0_57 = arith.constant 0 : index
    %c5_58 = arith.constant 5 : index
    %c0_59 = arith.constant 0 : index
    %76 = vector.load %arg4[%c0_57, %c5_58, %c0_59] : memref<1x8x128xf32, #tpu.memory_space<vmem>>, vector<1x1x128xf32>
    %77 = vector.shape_cast %76 : vector<1x1x128xf32> to vector<1x128xf32>
    %78 = vector.shape_cast %75 : vector<1x128xf32> to vector<1x1x128xf32>
    tpu.vector_store %arg4[%c0_57, %c5_58, %c0_59], %78 {strides = array<i32>} : memref<1x8x128xf32, #tpu.memory_space<vmem>>, vector<1x1x128xf32>,
    %c2_60 = arith.constant 2 : index
    %c0_61 = arith.constant 0 : index
    %c0_62 = arith.constant 0 : index
    %79 = vector.load %arg3[%c2_60, %c0_61, %c0_62] : memref<4x8x128xbf16, #tpu.memory_space<vmem>>, vector<1x8x128xbf16>
    %80 = vector.shape_cast %79 : vector<1x8x128xbf16> to vector<8x128xbf16>
    %81 = arith.extf %80 : vector<8x128xbf16> to vector<8x128xf32>
    %82 = arith.mulf %54, %81 : vector<8x128xf32>
    %cst_63 = arith.constant dense<0.000000e+00> : vector<128xf32>
    %83 = vector.multi_reduction <add>, %82, %cst_63 [0] : vector<8x128xf32> to vector<128xf32>
    %84 = vector.shape_cast %83 : vector<128xf32> to vector<1x128xf32>
    %c0_64 = arith.constant 0 : index
    %c6 = arith.constant 6 : index
    %c0_65 = arith.constant 0 : index
    %85 = vector.load %arg4[%c0_64, %c6, %c0_65] : memref<1x8x128xf32, #tpu.memory_space<vmem>>, vector<1x1x128xf32>
    %86 = vector.shape_cast %85 : vector<1x1x128xf32> to vector<1x128xf32>
    %87 = arith.addf %86, %84 : vector<1x128xf32>
    %c0_66 = arith.constant 0 : index
    %c6_67 = arith.constant 6 : index
    %c0_68 = arith.constant 0 : index
    %88 = vector.load %arg4[%c0_66, %c6_67, %c0_68] : memref<1x8x128xf32, #tpu.memory_space<vmem>>, vector<1x1x128xf32>
    %89 = vector.shape_cast %88 : vector<1x1x128xf32> to vector<1x128xf32>
    %90 = vector.shape_cast %87 : vector<1x128xf32> to vector<1x1x128xf32>
    tpu.vector_store %arg4[%c0_66, %c6_67, %c0_68], %90 {strides = array<i32>} : memref<1x8x128xf32, #tpu.memory_space<vmem>>, vector<1x1x128xf32>,
    %c3_69 = arith.constant 3 : index
    %c0_70 = arith.constant 0 : index
    %c0_71 = arith.constant 0 : index
    %91 = vector.load %arg3[%c3_69, %c0_70, %c0_71] : memref<4x8x128xbf16, #tpu.memory_space<vmem>>, vector<1x8x128xbf16>
    %92 = vector.shape_cast %91 : vector<1x8x128xbf16> to vector<8x128xbf16>
    %93 = arith.extf %92 : vector<8x128xbf16> to vector<8x128xf32>
    %94 = arith.mulf %54, %93 : vector<8x128xf32>
    %cst_72 = arith.constant dense<0.000000e+00> : vector<128xf32>
    %95 = vector.multi_reduction <add>, %94, %cst_72 [0] : vector<8x128xf32> to vector<128xf32>
    %96 = vector.shape_cast %95 : vector<128xf32> to vector<1x128xf32>
    %c0_73 = arith.constant 0 : index
    %c7 = arith.constant 7 : index
    %c0_74 = arith.constant 0 : index
    %97 = vector.load %arg4[%c0_73, %c7, %c0_74] : memref<1x8x128xf32, #tpu.memory_space<vmem>>, vector<1x1x128xf32>
    %98 = vector.shape_cast %97 : vector<1x1x128xf32> to vector<1x128xf32>
    %99 = arith.addf %98, %96 : vector<1x128xf32>
    %c0_75 = arith.constant 0 : index
    %c7_76 = arith.constant 7 : index
    %c0_77 = arith.constant 0 : index
    %100 = vector.load %arg4[%c0_75, %c7_76, %c0_77] : memref<1x8x128xf32, #tpu.memory_space<vmem>>, vector<1x1x128xf32>
    %101 = vector.shape_cast %100 : vector<1x1x128xf32> to vector<1x128xf32>
    %102 = vector.shape_cast %99 : vector<1x128xf32> to vector<1x1x128xf32>
    tpu.vector_store %arg4[%c0_75, %c7_76, %c0_77], %102 {strides = array<i32>} : memref<1x8x128xf32, #tpu.memory_space<vmem>>, vector<1x1x128xf32>,
    return
  }
  func.func @transform_0(%arg0: i32, %arg1: i32) -> (i32, i32, i32) {
    %c1_i32 = arith.constant 1 : i32
    %0 = arith.muli %arg0, %c1_i32 : i32
    %1 = arith.addi %0, %arg1 : i32
    %c0_i32 = arith.constant 0 : i32
    %c0_i32_0 = arith.constant 0 : i32
    %c0_i32_1 = arith.constant 0 : i32
    return %c0_i32, %1, %c0_i32_0 : i32, i32, i32
  }
  func.func @transform_1(%arg0: i32, %arg1: i32) -> (i32, i32, i32) {
    %c1_i32 = arith.constant 1 : i32
    %0 = arith.muli %arg0, %c1_i32 : i32
    %1 = arith.addi %0, %arg1 : i32
    %c0_i32 = arith.constant 0 : i32
    %c0_i32_0 = arith.constant 0 : i32
    %c0_i32_1 = arith.constant 0 : i32
    return %c0_i32, %1, %c0_i32_0 : i32, i32, i32
  }
  func.func @transform_2(%arg0: i32, %arg1: i32) -> (i32, i32, i32) {
    %c0_i32 = arith.constant 0 : i32
    %c0_i32_0 = arith.constant 0 : i32
    %c0_i32_1 = arith.constant 0 : i32
    return %arg0, %c0_i32, %c0_i32_0 : i32, i32, i32
  }
}

</mosaic_0001>

<llo_original>
// kernel: tpu_custom_call.1
$region0: #{tpu_custom_call.1}
  #allocation0 [shape = 'u32[]', space=smem, size = 0x4, offset = 0x4, fixed_abs, tag = 'smem constant byte address 0x4 - core index']
  #allocation1 [shape = 'u32[144,128]{1,0:T(1,128)}', space=vmem, size = 0x12000, scoped, tag = 'internal scratch']
  %s0 = inlined_call_operand.hbm [shape: f32[2,8,128], index: 0, kind: input, shape index: {}]
  %s1 = inlined_call_operand.hbm [shape: bf16[4,8,128], index: 1, kind: input, shape index: {}]
  %s2 = inlined_call_operand.hbm [shape: f32[1,8,128], index: 2, kind: output, shape index: {}]
  %s3 = sld [smem:[#allocation0]]
  $region30: #{tpu_custom_call.1} parent=0
    _
  %s5 = ssub.s32 1, %s3
  %s6 = scalar_select 0, %s5, %s3
  $region1: #{tpu_custom_call.1} parent=0
    #allocation2 [shape = 'u8[8192]{0}', space=vmem, size = 0x2000, scoped, tag = 'input window, operand 0, single buffered']
    #allocation3 [shape = 's32[1]{0}', space=sflag, size = 0x4, scoped, tag = 'scoped memory for tpu_custom_call.1']
    #allocation4 [shape = 's32[1]{0}', space=sflag, size = 0x4, scoped, tag = 'scoped memory for tpu_custom_call.1']
    #allocation5 [shape = 'u8[8192]{0}', space=vmem, size = 0x2000, scoped, tag = 'input window, operand 1, single buffered']
    #allocation6 [shape = 's32[1]{0}', space=sflag, size = 0x4, scoped, tag = 'scoped memory for tpu_custom_call.1']
    #allocation7 [shape = 'u8[4096]{0}', space=vmem, size = 0x1000, scoped, tag = 'output window, operand 0, single buffered']
    %7 = vsyncpa [#allocation3], 0
    %8 = vsyncpa [#allocation6], 0
    %9 = vsyncpa [#allocation4], 0
    // Predicated region
    $region2: #{tpu_custom_call.1} parent=1 // pred_check
      _
    $region3: #{tpu_custom_call.1} parent=1 // pred_check_branch
      %11 = sbr.rel (0) target = $region5
    $region4: #{tpu_custom_call.1} parent=1 // pred_region
      %s12 = sadd.s32 0, 0
      %s14 = ssub.s32 256, 256
      %15 = vsyncadd [#allocation3], %s14
      %s16 = smul.addr %s12, 128
      %s17 = scalar_lea.hbm %s0, %s16
      %s18 = sshll.u32 [#allocation2], 4
      %s19 = int_to_ptr.vmem [resolvable:$true] %s18
      %24 = dma.hbm_to_vmem [thread:$0]  %s17, 256, %s19, [#allocation3], 128, 128, 8
    $region5: #{tpu_custom_call.1} parent=1 // pred_fallthru
      _
    // Predicated region
    $region6: #{tpu_custom_call.1} parent=1 // pred_check
      _
    $region7: #{tpu_custom_call.1} parent=1 // pred_check_branch
      %26 = sbr.rel (0) target = $region9
    $region8: #{tpu_custom_call.1} parent=1 // pred_region
      %s27 = sadd.s32 0, 0
      %s29 = ssub.s32 256, 256
      %30 = vsyncadd [#allocation6], %s29
      %s31 = smul.addr %s27, 64
      %s32 = scalar_lea.hbm %s1, %s31
      %s33 = sshll.u32 [#allocation5], 4
      %s34 = int_to_ptr.vmem [resolvable:$true] %s33
      %39 = dma.hbm_to_vmem [thread:$0]  %s32, 256, %s34, [#allocation6], 64, 64, 4
    $region9: #{tpu_custom_call.1} parent=1 // pred_fallthru
      _
    // Predicated region
    $region10: #{tpu_custom_call.1} parent=1 // pred_check
      _
    $region11: #{tpu_custom_call.1} parent=1 // pred_check_branch
      %41 = sbr.rel (0) target = $region13
    $region12: #{tpu_custom_call.1} parent=1 // pred_region
      %42 = dma.done [#allocation3], 256
    $region13: #{tpu_custom_call.1} parent=1 // pred_fallthru
      _
    // Predicated region
    $region14: #{tpu_custom_call.1} parent=1 // pred_check
      _
    $region15: #{tpu_custom_call.1} parent=1 // pred_check_branch
      %44 = sbr.rel (0) target = $region17
    $region16: #{tpu_custom_call.1} parent=1 // pred_region
      %45 = dma.done [#allocation6], 256
    $region17: #{tpu_custom_call.1} parent=1 // pred_fallthru
      _
    %s46 = sadd.s32 0, 0
    %s47 = sadd.s32 0, 0
    %p48 = scmp.eq.s32.totalorder 0, 0
    // Predicated region
    $region18: #{tpu_custom_call.1} parent=1 // pred_check
      %p49 = pneg %p48
    $region19: #{tpu_custom_call.1} parent=1 // pred_check_branch
      %51 = sbr.rel (%p49) target = $region21
    $region20: #{tpu_custom_call.1} parent=1 // pred_region
      %52 = vst [vmem:[#allocation7] sm:$0xff] 0.0
    $region21: #{tpu_custom_call.1} parent=1 // pred_fallthru
      _
    %v53 = vld [vmem:[#allocation2] sm:$0xff]
    %v54 = vld [vmem:[#allocation5] sm:$0xf]
    %v55 = vunpack.c.l.bf16 %v54
    %v56 = vmul.f32 %v53, %v55
    %v57 = vrot.slane %v56, 4
    %v58 = vadd.f32 %v56, %v57
    %v59 = vrot.slane %v58, 2
    %v60 = vadd.f32 %v58, %v59
    %v61 = vrot.slane %v60, 1
    %v62 = vadd.f32 %v60, %v61
    %v63 = vld [vmem:[#allocation7] sm:$0x1]
    %v64 = vadd.f32 %v63, %v62
    %65 = vst [vmem:[#allocation7] sm:$0x1] %v64
    %s66 = scalar_lea.vmem [#allocation5], 4
    %v67 = vld [vmem:[%s66] sm:$0xf]
    %v68 = vunpack.c.l.bf16 %v67
    %v69 = vmul.f32 %v53, %v68
    %v70 = vrot.slane %v69, 4
    %v71 = vadd.f32 %v69, %v70
    %v72 = vrot.slane %v71, 2
    %v73 = vadd.f32 %v71, %v72
    %v74 = vrot.slane %v73, 1
    %v75 = vadd.f32 %v73, %v74
    %v76 = vld [vmem:[#allocation7 + $0x1] sm:$0x1]
    %v77 = vadd.f32 %v76, %v75
    %78 = vst [vmem:[#allocation7 + $0x1] sm:$0x1] %v77
    %s79 = scalar_lea.vmem [#allocation5], 8
    %v80 = vld [vmem:[%s79] sm:$0xf]
    %v81 = vunpack.c.l.bf16 %v80
    %v82 = vmul.f32 %v53, %v81
    %v83 = vrot.slane %v82, 4
    %v84 = vadd.f32 %v82, %v83
    %v85 = vrot.slane %v84, 2
    %v86 = vadd.f32 %v84, %v85
    %v87 = vrot.slane %v86, 1
    %v88 = vadd.f32 %v86, %v87
    %v89 = vld [vmem:[#allocation7 + $0x2] sm:$0x1]
    %v90 = vadd.f32 %v89, %v88
    %91 = vst [vmem:[#allocation7 + $0x2] sm:$0x1] %v90
    %s92 = scalar_lea.vmem [#allocation5], 12
    %v93 = vld [vmem:[%s92] sm:$0xf]
    %v94 = vunpack.c.l.bf16 %v93
    %v95 = vmul.f32 %v53, %v94
    %v96 = vrot.slane %v95, 4
    %v97 = vadd.f32 %v95, %v96
    %v98 = vrot.slane %v97, 2
    %v99 = vadd.f32 %v97, %v98
    %v100 = vrot.slane %v99, 1
    %v101 = vadd.f32 %v99, %v100
    %v102 = vld [vmem:[#allocation7 + $0x3] sm:$0x1]
    %v103 = vadd.f32 %v102, %v101
    %104 = vst [vmem:[#allocation7 + $0x3] sm:$0x1] %v103
    %s105 = scalar_lea.vmem [#allocation2], 8
    %v106 = vld [vmem:[%s105] sm:$0xff]
    %v107 = vld [vmem:[#allocation5] sm:$0xf]
    %v108 = vunpack.c.l.bf16 %v107
    %v109 = vmul.f32 %v106, %v108
    %v110 = vrot.slane %v109, 4
    %v111 = vadd.f32 %v109, %v110
    %v112 = vrot.slane %v111, 2
    %v113 = vadd.f32 %v111, %v112
    %v114 = vrot.slane %v113, 1
    %v115 = vadd.f32 %v113, %v114
    %v116 = vld [vmem:[#allocation7 + $0x4] sm:$0x1]
    %v117 = vadd.f32 %v116, %v115
    %118 = vst [vmem:[#allocation7 + $0x4] sm:$0x1] %v117
    %v119 = vld [vmem:[%s66] sm:$0xf]
    %v120 = vunpack.c.l.bf16 %v119
    %v121 = vmul.f32 %v106, %v120
    %v122 = vrot.slane %v121, 4
    %v123 = vadd.f32 %v121, %v122
    %v124 = vrot.slane %v123, 2
    %v125 = vadd.f32 %v123, %v124
    %v126 = vrot.slane %v125, 1
    %v127 = vadd.f32 %v125, %v126
    %v128 = vld [vmem:[#allocation7 + $0x5] sm:$0x1]
    %v129 = vadd.f32 %v128, %v127
    %130 = vst [vmem:[#allocation7 + $0x5] sm:$0x1] %v129
    %v131 = vld [vmem:[%s79] sm:$0xf]
    %v132 = vunpack.c.l.bf16 %v131
    %v133 = vmul.f32 %v106, %v132
    %v134 = vrot.slane %v133, 4
    %v135 = vadd.f32 %v133, %v134
    %v136 = vrot.slane %v135, 2
    %v137 = vadd.f32 %v135, %v136
    %v138 = vrot.slane %v137, 1
    %v139 = vadd.f32 %v137, %v138
    %v140 = vld [vmem:[#allocation7 + $0x6] sm:$0x1]
    %v141 = vadd.f32 %v140, %v139
    %142 = vst [vmem:[#allocation7 + $0x6] sm:$0x1] %v141
    %v143 = vld [vmem:[%s92] sm:$0xf]
    %v144 = vunpack.c.l.bf16 %v143
    %v145 = vmul.f32 %v106, %v144
    %v146 = vrot.slane %v145, 4
    %v147 = vadd.f32 %v145, %v146
    %v148 = vrot.slane %v147, 2
    %v149 = vadd.f32 %v147, %v148
    %v150 = vrot.slane %v149, 1
    %v151 = vadd.f32 %v149, %v150
    %v152 = vld [vmem:[#allocation7 + $0x7] sm:$0x1]
    %v153 = vadd.f32 %v152, %v151
    %154 = vst [vmem:[#allocation7 + $0x7] sm:$0x1] %v153
    // Predicated region
    $region22: #{tpu_custom_call.1} parent=1 // pred_check
      _
    $region23: #{tpu_custom_call.1} parent=1 // pred_check_branch
      %156 = sbr.rel (0) target = $region25
    $region24: #{tpu_custom_call.1} parent=1 // pred_region
      %s158 = ssub.s32 128, 128
      %159 = vsyncadd [#allocation4], %s158
      %s161 = sshll.u32 [#allocation7], 4
      %s162 = int_to_ptr.vmem [resolvable:$true] %s161
      %164 = dma.vmem_to_hbm [thread:$0]  %s162, 128, %s2, [#allocation4]
    $region25: #{tpu_custom_call.1} parent=1 // pred_fallthru
      _
    // Predicated region
    $region26: #{tpu_custom_call.1} parent=1 // pred_check
      _
    $region27: #{tpu_custom_call.1} parent=1 // pred_check_branch
      %166 = sbr.rel (0) target = $region29
    $region28: #{tpu_custom_call.1} parent=1 // pred_region
      %167 = dma.done [#allocation4], 128
    $region29: #{tpu_custom_call.1} parent=1 // pred_fallthru
      _
    %168 = vsyncpa [#allocation3], 1
    %169 = vsyncpa [#allocation6], 1
    %170 = vsyncpa [#allocation4], 1

</llo_original>
